<compile_context>
chip_gen: v7x
topology: tpu7x:2x2x1
jax: 0.10.0
libtpu: 0.0.40
codegen_flags: <defaults>
</compile_context>

<pallas_src>
import functools
import math

import jax
import jax.numpy as jnp
from jax import lax
from jax.experimental import pallas as pl
from jax.experimental.pallas import tpu as pltpu


# ----------------------------- Pallas kernel ------------------------------ #

def _blstm_policy_kernel(x_ref,        # (T*B, D)   f32, time-major rows
                         wih_ref,      # (D, 16H)   bf16  [fwd 8H | bwd 8H]
                         bz_ref,       # (2, 8H)    f32   row0=fwd, row1=bwd
                         whh_ref,      # (2H, 8H)   bf16  block-structured
                         wlin_ref,     # (2H, Cp)   bf16
                         blin_ref,     # (1, Cp)    f32
                         out_ref,      # out: (B, Cp) f32 log-probs
                         *, T, B, H, C):
    G = 8 * H          # per-step gate width covering both directions (=128)
    H2 = 2 * H

    # (1) all T input projections, both directions, one bf16 GEMM.
    x = x_ref[...].astype(jnp.bfloat16)                          # (T*B, D)
    zx_all = jnp.dot(x, wih_ref[...],
                     preferred_element_type=jnp.float32)         # (T*B, 2G)
    bz = bz_ref[...]                                             # (2, G)
    # fwd lanes of zx_f are real, bwd lanes exactly 0 (zero weight columns);
    # vice versa for zx_b -> per-step combine is a plain VPU add, no concat.
    zx_f = zx_all[:, :G] + bz[0:1, :]                            # (T*B, G)
    zx_b = zx_all[:, G:] + bz[1:2, :]                            # (T*B, G)

    whh = whh_ref[...]                                           # (2H, G)

    h = jnp.zeros((B, H2), jnp.float32)                          # [h_f | h_b]
    c = jnp.zeros((B, H2), jnp.float32)
    h_sum = jnp.zeros((B, H2), jnp.float32)

    # (2) fully unrolled recurrence (short fixed T); static slices only.
    for t in range(T):
        zf = zx_f[t * B:(t + 1) * B, :]                # fwd inputs @ time t
        zb = zx_b[(T - 1 - t) * B:(T - t) * B, :]      # bwd inputs @ T-1-t
        z = zf + zb + jnp.dot(h.astype(jnp.bfloat16), whh,
                              preferred_element_type=jnp.float32)  # (B, G)
        # two full-tile EUP pushes instead of four narrow ones
        s = jax.nn.sigmoid(z)
        th = jnp.tanh(z)
        # gate lane layout: [i_f,i_b, f_f,f_b, g_f,g_b, o_f,o_b] (H each)
        i = s[:, 0 * H2:1 * H2]
        f = s[:, 1 * H2:2 * H2]
        g = th[:, 2 * H2:3 * H2]
        o = s[:, 3 * H2:4 * H2]
        c = f * c + i * g
        h = o * jnp.tanh(c)
        h_sum = h_sum + h                              # only a VPU add in-loop

    # (3) fused tail: single projection + time-mean + bias + log-softmax.
    logits = jnp.dot(h_sum.astype(jnp.bfloat16), wlin_ref[...],
                     preferred_element_type=jnp.float32)         # (B, Cp)
    logits = logits * jnp.float32(1.0 / T) + blin_ref[...]
    lane = lax.broadcasted_iota(jnp.int32, logits.shape, 1)
    logits = jnp.where(lane < C, logits, jnp.full_like(logits, -1e30))
    m = jnp.max(logits, axis=-1, keepdims=True)
    lse = jnp.log(jnp.sum(jnp.exp(logits - m), axis=-1, keepdims=True)) + m
    out_ref[...] = logits - lse


# ------------------------------- wrappers ---------------------------------- #

def init_params(key, input_dim, hidden_dims, con_dim):
    """Deterministic init mirroring the PyTorch module's parameter shapes."""
    H = hidden_dims // 2
    k_lstm = 1.0 / math.sqrt(H)
    k_lin = 1.0 / math.sqrt(hidden_dims)
    ks = jax.random.split(key, 9)
    u = lambda k, shape, b: jax.random.uniform(k, shape, jnp.float32, -b, b)
    return dict(
        w_ih_f=u(ks[0], (4 * H, input_dim), k_lstm),
        w_hh_f=u(ks[1], (4 * H, H), k_lstm),
        b_ih_f=u(ks[2], (4 * H,), k_lstm),
        b_hh_f=u(ks[3], (4 * H,), k_lstm),
        w_ih_b=u(ks[4], (4 * H, input_dim), k_lstm),
        w_hh_b=u(ks[5], (4 * H, H), k_lstm),
        b_ih_b=u(ks[6], (4 * H,), k_lstm),
        b_hh_b=u(ks[7], (4 * H,), k_lstm),
        w_lin=u(ks[8], (con_dim, hidden_dims), k_lin),
        b_lin=jnp.zeros((con_dim,), jnp.float32),     # nn.init.zeros_(bias)
    )


def prepare_kernel_weights(params):
    """One-time prep of kernel-ready weights: per-gate [fwd|bwd] lane layout,
    bias rows, lane padding, bf16 MXU operands."""
    H = params["w_hh_f"].shape[1]
    C = params["b_lin"].shape[0]
    Cp = ((C + 127) // 128) * 128

    def place(w4h, direction):
        # w4h: (rows, 4H) in PyTorch gate order [i,f,g,o] ->
        # (rows, 8H) with per-gate [fwd(H)|bwd(H)] lane sub-blocks, zeros in
        # the off-direction sub-block.
        rows = w4h.shape[0]
        w = w4h.reshape(rows, 4, H)
        z = jnp.zeros_like(w)
        stacked = jnp.stack([w, z] if direction == 0 else [z, w], axis=2)
        return stacked.reshape(rows, 8 * H)

    wih = jnp.concatenate([place(params["w_ih_f"].T, 0),
                           place(params["w_ih_b"].T, 1)], axis=1)  # (D, 16H)
    b_z = jnp.concatenate(
        [place((params["b_ih_f"] + params["b_hh_f"]).reshape(1, 4 * H), 0),
         place((params["b_ih_b"] + params["b_hh_b"]).reshape(1, 4 * H), 1)],
        axis=0)                                                    # (2, 8H)
    whh = jnp.concatenate([place(params["w_hh_f"].T, 0),
                           place(params["w_hh_b"].T, 1)], axis=0)  # (2H, 8H)

    pad = ((0, 0), (0, Cp - C))
    wlin = jnp.pad(params["w_lin"].T, pad)                         # (2H, Cp)
    blin = jnp.pad(params["b_lin"].reshape(1, C), pad)             # (1, Cp)

    return dict(
        wih=wih.astype(jnp.bfloat16),
        b_z=b_z.astype(jnp.float32),
        whh=whh.astype(jnp.bfloat16),
        wlin=wlin.astype(jnp.bfloat16),
        blin=blin.astype(jnp.float32),
        con_dim=int(C), hidden=int(H),
    )


def blstm_policy_logprobs(prep, seq):
    """Pallas-computed log-probs of mean_t Linear(BLSTM(seq)); shape (B, Cp)."""
    B, T, D = seq.shape
    H = prep["hidden"]
    C = prep["con_dim"]
    Cp = prep["blin"].shape[1]

    # single fused XLA transpose to time-major rows; everything else
    # (bias folding, direction handling, reversal) lives in the kernel.
    x_tm = jnp.transpose(seq, (1, 0, 2)).reshape(T * B, D).astype(jnp.float32)

    vmem = pl.BlockSpec(memory_space=pltpu.MemorySpace.VMEM)
    return pl.pallas_call(
        functools.partial(_blstm_policy_kernel, T=T, B=B, H=H, C=C),
        out_shape=jax.ShapeDtypeStruct((B, Cp), jnp.float32),
        in_specs=[vmem] * 6,
        out_specs=vmem,
    )(x_tm, prep["wih"], prep["b_z"], prep["whh"], prep["wlin"], prep["blin"])


def blstm_policy_forward(prep, seq, key, gt=None):
    """Mirrors BLSTMPolicy.forward: returns (label, loggt, logp)."""
    C = prep["con_dim"]
    logprobs = blstm_policy_logprobs(prep, seq)[:, :C]         # (B, C)
    # log-probs are shifted logits -> valid directly for categorical sampling
    label = jax.random.categorical(key, logprobs, axis=-1)     # (B,)
    logp = jnp.take_along_axis(logprobs, label[:, None], axis=-1)[:, 0]
    loggt = None
    if gt is not None:
        loggt = jnp.take_along_axis(
            logprobs, gt.astype(jnp.int32)[:, None], axis=-1)[:, 0]
    return label, loggt, logp


# ----------------------- pure-JAX reference (check) ------------------------ #

def _ref_logits(params, seq):
    B, T, D = seq.shape
    H = params["w_hh_f"].shape[1]

    def run_dir(wih, whh, b, xs):
        def step(carry, x):
            h, c = carry
            z = x @ wih.T + h @ whh.T + b
            i = jax.nn.sigmoid(z[:, :H])
            f = jax.nn.sigmoid(z[:, H:2 * H])
            g = jnp.tanh(z[:, 2 * H:3 * H])
            o = jax.nn.sigmoid(z[:, 3 * H:])
            c = f * c + i * g
            h = o * jnp.tanh(c)
            return (h, c), h
        zeros = jnp.zeros((B, H), jnp.float32)
        _, hs = lax.scan(step, (zeros, zeros), xs)
        return hs                                              # (T, B, H)

    xs = jnp.transpose(seq, (1, 0, 2))
    hf = run_dir(params["w_ih_f"], params["w_hh_f"],
                 params["b_ih_f"] + params["b_hh_f"], xs)
    hb = run_dir(params["w_ih_b"], params["w_hh_b"],
                 params["b_ih_b"] + params["b_hh_b"], xs[::-1])[::-1]
    out = jnp.concatenate([hf, hb], axis=-1)                   # (T, B, 2H)
    logit_seq = out @ params["w_lin"].T + params["b_lin"]      # (T, B, C)
    return jnp.mean(logit_seq, axis=0)                         # (B, C)


# --------------------------------- main ------------------------------------ #

if __name__ == "__main__":
    B, T, D = 2, 8, 16          # batch=2, seq=8, input_dim=16
    hidden_dims, con_dim = 32, 4

    key = jax.random.PRNGKey(0)
    k_param, k_seq, k_sample, k_gt = jax.random.split(key, 4)

    params = init_params(k_param, D, hidden_dims, con_dim)
    prep = prepare_kernel_weights(params)
    seq = jax.random.normal(k_seq, (B, T, D), jnp.float32)
    gt = jax.random.randint(k_gt, (B,), 0, con_dim)

    fwd = jax.jit(lambda s, k, g: blstm_policy_forward(prep, s, k, g))
    label, loggt, logp = fwd(seq, k_sample, gt)
    jax.block_until_ready((label, loggt, logp))

    # sanity: kernel log-probs vs pure-JAX f32 reference
    # (tolerance also covers the bf16 MXU operands used in the kernel)
    kern_lp = jax.block_until_ready(
        blstm_policy_logprobs(prep, seq)[:, :con_dim])
    ref_lp = jax.block_until_ready(
        jax.nn.log_softmax(_ref_logits(params, seq), axis=-1))
    assert jnp.allclose(kern_lp, ref_lp, rtol=3e-2, atol=3e-2), (kern_lp, ref_lp)

    print("KERNEL_OK")
</pallas_src>

<mosaic_0001>
module attributes {stable_mosaic.version = 11 : i64} {
  func.func @_blstm_policy_kernel(%arg0: memref<16x16xf32, #tpu.memory_space<vmem>>, %arg1: memref<16x256xbf16, #tpu.memory_space<vmem>>, %arg2: memref<2x128xf32, #tpu.memory_space<vmem>>, %arg3: memref<32x128xbf16, #tpu.memory_space<vmem>>, %arg4: memref<32x128xbf16, #tpu.memory_space<vmem>>, %arg5: memref<1x128xf32, #tpu.memory_space<vmem>>, %arg6: memref<2x128xf32, #tpu.memory_space<vmem>>) attributes {dimension_semantics = [], scalar_prefetch = 0 : i64, scratch_operands = 0 : i64, tpu.core_type = #tpu.core_type<tc>} {
    %c0 = arith.constant 0 : index
    %c0_0 = arith.constant 0 : index
    %0 = vector.load %arg0[%c0, %c0_0] : memref<16x16xf32, #tpu.memory_space<vmem>>, vector<16x16xf32>
    %1 = arith.truncf %0 : vector<16x16xf32> to vector<16x16xbf16>
    %c0_1 = arith.constant 0 : index
    %c0_2 = arith.constant 0 : index
    %2 = vector.load %arg1[%c0_1, %c0_2] : memref<16x256xbf16, #tpu.memory_space<vmem>>, vector<16x256xbf16>
    %cst = arith.constant dense<0.000000e+00> : vector<16x256xf32>
    %3 = tpu.matmul %1, %2, %cst {dimension_numbers = #tpu.dot_dimension_numbers<[1], [0], [0], [1], [0, 0, 1, 1], [], []>} : vector<16x16xbf16>, vector<16x256xbf16>, vector<16x256xf32> -> vector<16x256xf32>
    %c0_3 = arith.constant 0 : index
    %c0_4 = arith.constant 0 : index
    %4 = vector.load %arg2[%c0_3, %c0_4] : memref<2x128xf32, #tpu.memory_space<vmem>>, vector<2x128xf32>
    %5 = vector.extract_strided_slice %3 {offsets = [0, 0], sizes = [16, 128], strides = [1, 1]} : vector<16x256xf32> to vector<16x128xf32>
    %6 = vector.extract_strided_slice %4 {offsets = [0, 0], sizes = [1, 128], strides = [1, 1]} : vector<2x128xf32> to vector<1x128xf32>
    %7 = vector.broadcast %6 : vector<1x128xf32> to vector<16x128xf32>
    %8 = arith.addf %5, %7 : vector<16x128xf32>
    %9 = vector.extract_strided_slice %3 {offsets = [0, 128], sizes = [16, 128], strides = [1, 1]} : vector<16x256xf32> to vector<16x128xf32>
    %10 = vector.extract_strided_slice %4 {offsets = [1, 0], sizes = [1, 128], strides = [1, 1]} : vector<2x128xf32> to vector<1x128xf32>
    %11 = vector.broadcast %10 : vector<1x128xf32> to vector<16x128xf32>
    %12 = arith.addf %9, %11 : vector<16x128xf32>
    %c0_5 = arith.constant 0 : index
    %c0_6 = arith.constant 0 : index
    %13 = vector.load %arg3[%c0_5, %c0_6] : memref<32x128xbf16, #tpu.memory_space<vmem>>, vector<32x128xbf16>
    %cst_7 = arith.constant 0.000000e+00 : f32
    %14 = vector.broadcast %cst_7 : f32 to vector<2x32xf32>
    %cst_8 = arith.constant 0.000000e+00 : f32
    %15 = vector.broadcast %cst_8 : f32 to vector<2x32xf32>
    %cst_9 = arith.constant 0.000000e+00 : f32
    %16 = vector.broadcast %cst_9 : f32 to vector<2x32xf32>
    %17 = vector.extract_strided_slice %8 {offsets = [0, 0], sizes = [2, 128], strides = [1, 1]} : vector<16x128xf32> to vector<2x128xf32>
    %18 = vector.extract_strided_slice %12 {offsets = [14, 0], sizes = [2, 128], strides = [1, 1]} : vector<16x128xf32> to vector<2x128xf32>
    %19 = arith.addf %17, %18 : vector<2x128xf32>
    %20 = arith.truncf %14 : vector<2x32xf32> to vector<2x32xbf16>
    %cst_10 = arith.constant dense<0.000000e+00> : vector<2x128xf32>
    %21 = tpu.matmul %20, %13, %cst_10 {dimension_numbers = #tpu.dot_dimension_numbers<[1], [0], [0], [1], [0, 0, 1, 1], [], []>} : vector<2x32xbf16>, vector<32x128xbf16>, vector<2x128xf32> -> vector<2x128xf32>
    %22 = arith.addf %19, %21 : vector<2x128xf32>
    %23 = arith.negf %22 : vector<2x128xf32>
    %24 = math.exp %23 : vector<2x128xf32>
    %cst_11 = arith.constant 1.000000e+00 : f32
    %25 = vector.broadcast %cst_11 : f32 to vector<2x128xf32>
    %26 = arith.addf %25, %24 : vector<2x128xf32>
    %27 = arith.divf %25, %26 : vector<2x128xf32>
    %28 = math.tanh %22 : vector<2x128xf32>
    %29 = vector.extract_strided_slice %27 {offsets = [0, 0], sizes = [2, 32], strides = [1, 1]} : vector<2x128xf32> to vector<2x32xf32>
    %30 = vector.extract_strided_slice %27 {offsets = [0, 32], sizes = [2, 32], strides = [1, 1]} : vector<2x128xf32> to vector<2x32xf32>
    %31 = vector.extract_strided_slice %28 {offsets = [0, 64], sizes = [2, 32], strides = [1, 1]} : vector<2x128xf32> to vector<2x32xf32>
    %32 = vector.extract_strided_slice %27 {offsets = [0, 96], sizes = [2, 32], strides = [1, 1]} : vector<2x128xf32> to vector<2x32xf32>
    %33 = arith.mulf %30, %15 : vector<2x32xf32>
    %34 = arith.mulf %29, %31 : vector<2x32xf32>
    %35 = arith.addf %33, %34 : vector<2x32xf32>
    %36 = math.tanh %35 : vector<2x32xf32>
    %37 = arith.mulf %32, %36 : vector<2x32xf32>
    %38 = arith.addf %16, %37 : vector<2x32xf32>
    %39 = vector.extract_strided_slice %8 {offsets = [2, 0], sizes = [2, 128], strides = [1, 1]} : vector<16x128xf32> to vector<2x128xf32>
    %40 = vector.extract_strided_slice %12 {offsets = [12, 0], sizes = [2, 128], strides = [1, 1]} : vector<16x128xf32> to vector<2x128xf32>
    %41 = arith.addf %39, %40 : vector<2x128xf32>
    %42 = arith.truncf %37 : vector<2x32xf32> to vector<2x32xbf16>
    %cst_12 = arith.constant dense<0.000000e+00> : vector<2x128xf32>
    %43 = tpu.matmul %42, %13, %cst_12 {dimension_numbers = #tpu.dot_dimension_numbers<[1], [0], [0], [1], [0, 0, 1, 1], [], []>} : vector<2x32xbf16>, vector<32x128xbf16>, vector<2x128xf32> -> vector<2x128xf32>
    %44 = arith.addf %41, %43 : vector<2x128xf32>
    %45 = arith.negf %44 : vector<2x128xf32>
    %46 = math.exp %45 : vector<2x128xf32>
    %cst_13 = arith.constant 1.000000e+00 : f32
    %47 = vector.broadcast %cst_13 : f32 to vector<2x128xf32>
    %48 = arith.addf %47, %46 : vector<2x128xf32>
    %49 = arith.divf %47, %48 : vector<2x128xf32>
    %50 = math.tanh %44 : vector<2x128xf32>
    %51 = vector.extract_strided_slice %49 {offsets = [0, 0], sizes = [2, 32], strides = [1, 1]} : vector<2x128xf32> to vector<2x32xf32>
    %52 = vector.extract_strided_slice %49 {offsets = [0, 32], sizes = [2, 32], strides = [1, 1]} : vector<2x128xf32> to vector<2x32xf32>
    %53 = vector.extract_strided_slice %50 {offsets = [0, 64], sizes = [2, 32], strides = [1, 1]} : vector<2x128xf32> to vector<2x32xf32>
    %54 = vector.extract_strided_slice %49 {offsets = [0, 96], sizes = [2, 32], strides = [1, 1]} : vector<2x128xf32> to vector<2x32xf32>
    %55 = arith.mulf %52, %35 : vector<2x32xf32>
    %56 = arith.mulf %51, %53 : vector<2x32xf32>
    %57 = arith.addf %55, %56 : vector<2x32xf32>
    %58 = math.tanh %57 : vector<2x32xf32>
    %59 = arith.mulf %54, %58 : vector<2x32xf32>
    %60 = arith.addf %38, %59 : vector<2x32xf32>
    %61 = vector.extract_strided_slice %8 {offsets = [4, 0], sizes = [2, 128], strides = [1, 1]} : vector<16x128xf32> to vector<2x128xf32>
    %62 = vector.extract_strided_slice %12 {offsets = [10, 0], sizes = [2, 128], strides = [1, 1]} : vector<16x128xf32> to vector<2x128xf32>
    %63 = arith.addf %61, %62 : vector<2x128xf32>
    %64 = arith.truncf %59 : vector<2x32xf32> to vector<2x32xbf16>
    %cst_14 = arith.constant dense<0.000000e+00> : vector<2x128xf32>
    %65 = tpu.matmul %64, %13, %cst_14 {dimension_numbers = #tpu.dot_dimension_numbers<[1], [0], [0], [1], [0, 0, 1, 1], [], []>} : vector<2x32xbf16>, vector<32x128xbf16>, vector<2x128xf32> -> vector<2x128xf32>
    %66 = arith.addf %63, %65 : vector<2x128xf32>
    %67 = arith.negf %66 : vector<2x128xf32>
    %68 = math.exp %67 : vector<2x128xf32>
    %cst_15 = arith.constant 1.000000e+00 : f32
    %69 = vector.broadcast %cst_15 : f32 to vector<2x128xf32>
    %70 = arith.addf %69, %68 : vector<2x128xf32>
    %71 = arith.divf %69, %70 : vector<2x128xf32>
    %72 = math.tanh %66 : vector<2x128xf32>
    %73 = vector.extract_strided_slice %71 {offsets = [0, 0], sizes = [2, 32], strides = [1, 1]} : vector<2x128xf32> to vector<2x32xf32>
    %74 = vector.extract_strided_slice %71 {offsets = [0, 32], sizes = [2, 32], strides = [1, 1]} : vector<2x128xf32> to vector<2x32xf32>
    %75 = vector.extract_strided_slice %72 {offsets = [0, 64], sizes = [2, 32], strides = [1, 1]} : vector<2x128xf32> to vector<2x32xf32>
    %76 = vector.extract_strided_slice %71 {offsets = [0, 96], sizes = [2, 32], strides = [1, 1]} : vector<2x128xf32> to vector<2x32xf32>
    %77 = arith.mulf %74, %57 : vector<2x32xf32>
    %78 = arith.mulf %73, %75 : vector<2x32xf32>
    %79 = arith.addf %77, %78 : vector<2x32xf32>
    %80 = math.tanh %79 : vector<2x32xf32>
    %81 = arith.mulf %76, %80 : vector<2x32xf32>
    %82 = arith.addf %60, %81 : vector<2x32xf32>
    %83 = vector.extract_strided_slice %8 {offsets = [6, 0], sizes = [2, 128], strides = [1, 1]} : vector<16x128xf32> to vector<2x128xf32>
    %84 = vector.extract_strided_slice %12 {offsets = [8, 0], sizes = [2, 128], strides = [1, 1]} : vector<16x128xf32> to vector<2x128xf32>
    %85 = arith.addf %83, %84 : vector<2x128xf32>
    %86 = arith.truncf %81 : vector<2x32xf32> to vector<2x32xbf16>
    %cst_16 = arith.constant dense<0.000000e+00> : vector<2x128xf32>
    %87 = tpu.matmul %86, %13, %cst_16 {dimension_numbers = #tpu.dot_dimension_numbers<[1], [0], [0], [1], [0, 0, 1, 1], [], []>} : vector<2x32xbf16>, vector<32x128xbf16>, vector<2x128xf32> -> vector<2x128xf32>
    %88 = arith.addf %85, %87 : vector<2x128xf32>
    %89 = arith.negf %88 : vector<2x128xf32>
    %90 = math.exp %89 : vector<2x128xf32>
    %cst_17 = arith.constant 1.000000e+00 : f32
    %91 = vector.broadcast %cst_17 : f32 to vector<2x128xf32>
    %92 = arith.addf %91, %90 : vector<2x128xf32>
    %93 = arith.divf %91, %92 : vector<2x128xf32>
    %94 = math.tanh %88 : vector<2x128xf32>
    %95 = vector.extract_strided_slice %93 {offsets = [0, 0], sizes = [2, 32], strides = [1, 1]} : vector<2x128xf32> to vector<2x32xf32>
    %96 = vector.extract_strided_slice %93 {offsets = [0, 32], sizes = [2, 32], strides = [1, 1]} : vector<2x128xf32> to vector<2x32xf32>
    %97 = vector.extract_strided_slice %94 {offsets = [0, 64], sizes = [2, 32], strides = [1, 1]} : vector<2x128xf32> to vector<2x32xf32>
    %98 = vector.extract_strided_slice %93 {offsets = [0, 96], sizes = [2, 32], strides = [1, 1]} : vector<2x128xf32> to vector<2x32xf32>
    %99 = arith.mulf %96, %79 : vector<2x32xf32>
    %100 = arith.mulf %95, %97 : vector<2x32xf32>
    %101 = arith.addf %99, %100 : vector<2x32xf32>
    %102 = math.tanh %101 : vector<2x32xf32>
    %103 = arith.mulf %98, %102 : vector<2x32xf32>
    %104 = arith.addf %82, %103 : vector<2x32xf32>
    %105 = vector.extract_strided_slice %8 {offsets = [8, 0], sizes = [2, 128], strides = [1, 1]} : vector<16x128xf32> to vector<2x128xf32>
    %106 = vector.extract_strided_slice %12 {offsets = [6, 0], sizes = [2, 128], strides = [1, 1]} : vector<16x128xf32> to vector<2x128xf32>
    %107 = arith.addf %105, %106 : vector<2x128xf32>
    %108 = arith.truncf %103 : vector<2x32xf32> to vector<2x32xbf16>
    %cst_18 = arith.constant dense<0.000000e+00> : vector<2x128xf32>
    %109 = tpu.matmul %108, %13, %cst_18 {dimension_numbers = #tpu.dot_dimension_numbers<[1], [0], [0], [1], [0, 0, 1, 1], [], []>} : vector<2x32xbf16>, vector<32x128xbf16>, vector<2x128xf32> -> vector<2x128xf32>
    %110 = arith.addf %107, %109 : vector<2x128xf32>
    %111 = arith.negf %110 : vector<2x128xf32>
    %112 = math.exp %111 : vector<2x128xf32>
    %cst_19 = arith.constant 1.000000e+00 : f32
    %113 = vector.broadcast %cst_19 : f32 to vector<2x128xf32>
    %114 = arith.addf %113, %112 : vector<2x128xf32>
    %115 = arith.divf %113, %114 : vector<2x128xf32>
    %116 = math.tanh %110 : vector<2x128xf32>
    %117 = vector.extract_strided_slice %115 {offsets = [0, 0], sizes = [2, 32], strides = [1, 1]} : vector<2x128xf32> to vector<2x32xf32>
    %118 = vector.extract_strided_slice %115 {offsets = [0, 32], sizes = [2, 32], strides = [1, 1]} : vector<2x128xf32> to vector<2x32xf32>
    %119 = vector.extract_strided_slice %116 {offsets = [0, 64], sizes = [2, 32], strides = [1, 1]} : vector<2x128xf32> to vector<2x32xf32>
    %120 = vector.extract_strided_slice %115 {offsets = [0, 96], sizes = [2, 32], strides = [1, 1]} : vector<2x128xf32> to vector<2x32xf32>
    %121 = arith.mulf %118, %101 : vector<2x32xf32>
    %122 = arith.mulf %117, %119 : vector<2x32xf32>
    %123 = arith.addf %121, %122 : vector<2x32xf32>
    %124 = math.tanh %123 : vector<2x32xf32>
    %125 = arith.mulf %120, %124 : vector<2x32xf32>
    %126 = arith.addf %104, %125 : vector<2x32xf32>
    %127 = vector.extract_strided_slice %8 {offsets = [10, 0], sizes = [2, 128], strides = [1, 1]} : vector<16x128xf32> to vector<2x128xf32>
    %128 = vector.extract_strided_slice %12 {offsets = [4, 0], sizes = [2, 128], strides = [1, 1]} : vector<16x128xf32> to vector<2x128xf32>
    %129 = arith.addf %127, %128 : vector<2x128xf32>
    %130 = arith.truncf %125 : vector<2x32xf32> to vector<2x32xbf16>
    %cst_20 = arith.constant dense<0.000000e+00> : vector<2x128xf32>
    %131 = tpu.matmul %130, %13, %cst_20 {dimension_numbers = #tpu.dot_dimension_numbers<[1], [0], [0], [1], [0, 0, 1, 1], [], []>} : vector<2x32xbf16>, vector<32x128xbf16>, vector<2x128xf32> -> vector<2x128xf32>
    %132 = arith.addf %129, %131 : vector<2x128xf32>
    %133 = arith.negf %132 : vector<2x128xf32>
    %134 = math.exp %133 : vector<2x128xf32>
    %cst_21 = arith.constant 1.000000e+00 : f32
    %135 = vector.broadcast %cst_21 : f32 to vector<2x128xf32>
    %136 = arith.addf %135, %134 : vector<2x128xf32>
    %137 = arith.divf %135, %136 : vector<2x128xf32>
    %138 = math.tanh %132 : vector<2x128xf32>
    %139 = vector.extract_strided_slice %137 {offsets = [0, 0], sizes = [2, 32], strides = [1, 1]} : vector<2x128xf32> to vector<2x32xf32>
    %140 = vector.extract_strided_slice %137 {offsets = [0, 32], sizes = [2, 32], strides = [1, 1]} : vector<2x128xf32> to vector<2x32xf32>
    %141 = vector.extract_strided_slice %138 {offsets = [0, 64], sizes = [2, 32], strides = [1, 1]} : vector<2x128xf32> to vector<2x32xf32>
    %142 = vector.extract_strided_slice %137 {offsets = [0, 96], sizes = [2, 32], strides = [1, 1]} : vector<2x128xf32> to vector<2x32xf32>
    %143 = arith.mulf %140, %123 : vector<2x32xf32>
    %144 = arith.mulf %139, %141 : vector<2x32xf32>
    %145 = arith.addf %143, %144 : vector<2x32xf32>
    %146 = math.tanh %145 : vector<2x32xf32>
    %147 = arith.mulf %142, %146 : vector<2x32xf32>
    %148 = arith.addf %126, %147 : vector<2x32xf32>
    %149 = vector.extract_strided_slice %8 {offsets = [12, 0], sizes = [2, 128], strides = [1, 1]} : vector<16x128xf32> to vector<2x128xf32>
    %150 = vector.extract_strided_slice %12 {offsets = [2, 0], sizes = [2, 128], strides = [1, 1]} : vector<16x128xf32> to vector<2x128xf32>
    %151 = arith.addf %149, %150 : vector<2x128xf32>
    %152 = arith.truncf %147 : vector<2x32xf32> to vector<2x32xbf16>
    %cst_22 = arith.constant dense<0.000000e+00> : vector<2x128xf32>
    %153 = tpu.matmul %152, %13, %cst_22 {dimension_numbers = #tpu.dot_dimension_numbers<[1], [0], [0], [1], [0, 0, 1, 1], [], []>} : vector<2x32xbf16>, vector<32x128xbf16>, vector<2x128xf32> -> vector<2x128xf32>
    %154 = arith.addf %151, %153 : vector<2x128xf32>
    %155 = arith.negf %154 : vector<2x128xf32>
    %156 = math.exp %155 : vector<2x128xf32>
    %cst_23 = arith.constant 1.000000e+00 : f32
    %157 = vector.broadcast %cst_23 : f32 to vector<2x128xf32>
    %158 = arith.addf %157, %156 : vector<2x128xf32>
    %159 = arith.divf %157, %158 : vector<2x128xf32>
    %160 = math.tanh %154 : vector<2x128xf32>
    %161 = vector.extract_strided_slice %159 {offsets = [0, 0], sizes = [2, 32], strides = [1, 1]} : vector<2x128xf32> to vector<2x32xf32>
    %162 = vector.extract_strided_slice %159 {offsets = [0, 32], sizes = [2, 32], strides = [1, 1]} : vector<2x128xf32> to vector<2x32xf32>
    %163 = vector.extract_strided_slice %160 {offsets = [0, 64], sizes = [2, 32], strides = [1, 1]} : vector<2x128xf32> to vector<2x32xf32>
    %164 = vector.extract_strided_slice %159 {offsets = [0, 96], sizes = [2, 32], strides = [1, 1]} : vector<2x128xf32> to vector<2x32xf32>
    %165 = arith.mulf %162, %145 : vector<2x32xf32>
    %166 = arith.mulf %161, %163 : vector<2x32xf32>
    %167 = arith.addf %165, %166 : vector<2x32xf32>
    %168 = math.tanh %167 : vector<2x32xf32>
    %169 = arith.mulf %164, %168 : vector<2x32xf32>
    %170 = arith.addf %148, %169 : vector<2x32xf32>
    %171 = vector.extract_strided_slice %8 {offsets = [14, 0], sizes = [2, 128], strides = [1, 1]} : vector<16x128xf32> to vector<2x128xf32>
    %172 = vector.extract_strided_slice %12 {offsets = [0, 0], sizes = [2, 128], strides = [1, 1]} : vector<16x128xf32> to vector<2x128xf32>
    %173 = arith.addf %171, %172 : vector<2x128xf32>
    %174 = arith.truncf %169 : vector<2x32xf32> to vector<2x32xbf16>
    %cst_24 = arith.constant dense<0.000000e+00> : vector<2x128xf32>
    %175 = tpu.matmul %174, %13, %cst_24 {dimension_numbers = #tpu.dot_dimension_numbers<[1], [0], [0], [1], [0, 0, 1, 1], [], []>} : vector<2x32xbf16>, vector<32x128xbf16>, vector<2x128xf32> -> vector<2x128xf32>
    %176 = arith.addf %173, %175 : vector<2x128xf32>
    %177 = arith.negf %176 : vector<2x128xf32>
    %178 = math.exp %177 : vector<2x128xf32>
    %cst_25 = arith.constant 1.000000e+00 : f32
    %179 = vector.broadcast %cst_25 : f32 to vector<2x128xf32>
    %180 = arith.addf %179, %178 : vector<2x128xf32>
    %181 = arith.divf %179, %180 : vector<2x128xf32>
    %182 = math.tanh %176 : vector<2x128xf32>
    %183 = vector.extract_strided_slice %181 {offsets = [0, 0], sizes = [2, 32], strides = [1, 1]} : vector<2x128xf32> to vector<2x32xf32>
    %184 = vector.extract_strided_slice %181 {offsets = [0, 32], sizes = [2, 32], strides = [1, 1]} : vector<2x128xf32> to vector<2x32xf32>
    %185 = vector.extract_strided_slice %182 {offsets = [0, 64], sizes = [2, 32], strides = [1, 1]} : vector<2x128xf32> to vector<2x32xf32>
    %186 = vector.extract_strided_slice %181 {offsets = [0, 96], sizes = [2, 32], strides = [1, 1]} : vector<2x128xf32> to vector<2x32xf32>
    %187 = arith.mulf %184, %167 : vector<2x32xf32>
    %188 = arith.mulf %183, %185 : vector<2x32xf32>
    %189 = arith.addf %187, %188 : vector<2x32xf32>
    %190 = math.tanh %189 : vector<2x32xf32>
    %191 = arith.mulf %186, %190 : vector<2x32xf32>
    %192 = arith.addf %170, %191 : vector<2x32xf32>
    %193 = arith.truncf %192 : vector<2x32xf32> to vector<2x32xbf16>
    %c0_26 = arith.constant 0 : index
    %c0_27 = arith.constant 0 : index
    %194 = vector.load %arg4[%c0_26, %c0_27] : memref<32x128xbf16, #tpu.memory_space<vmem>>, vector<32x128xbf16>
    %cst_28 = arith.constant dense<0.000000e+00> : vector<2x128xf32>
    %195 = tpu.matmul %193, %194, %cst_28 {dimension_numbers = #tpu.dot_dimension_numbers<[1], [0], [0], [1], [0, 0, 1, 1], [], []>} : vector<2x32xbf16>, vector<32x128xbf16>, vector<2x128xf32> -> vector<2x128xf32>
    %cst_29 = arith.constant 1.250000e-01 : f32
    %196 = vector.broadcast %cst_29 : f32 to vector<2x128xf32>
    %197 = arith.mulf %195, %196 : vector<2x128xf32>
    %c0_30 = arith.constant 0 : index
    %c0_31 = arith.constant 0 : index
    %198 = vector.load %arg5[%c0_30, %c0_31] : memref<1x128xf32, #tpu.memory_space<vmem>>, vector<1x128xf32>
    %199 = vector.broadcast %198 : vector<1x128xf32> to vector<2x128xf32>
    %200 = arith.addf %197, %199 : vector<2x128xf32>
    %201 = tpu.iota {dimensions = array<i32: 1>} : vector<2x128xi32>
    %c4_i32 = arith.constant 4 : i32
    %202 = vector.broadcast %c4_i32 : i32 to vector<2x128xi32>
    %203 = arith.cmpi slt, %201, %202 : vector<2x128xi32>
    %cst_32 = arith.constant -1.000000e+30 : f32
    %204 = vector.broadcast %cst_32 : f32 to vector<2x128xf32>
    %205 = arith.select %203, %200, %204 : vector<2x128xi1>, vector<2x128xf32>
    %cst_33 = arith.constant dense<0xFF800000> : vector<2xf32>
    %206 = vector.multi_reduction <maximumf>, %205, %cst_33 [1] : vector<2x128xf32> to vector<2xf32>
    %207 = vector.shape_cast %206 : vector<2xf32> to vector<2x1xf32>
    %208 = vector.broadcast %207 : vector<2x1xf32> to vector<2x128xf32>
    %209 = arith.subf %205, %208 : vector<2x128xf32>
    %210 = math.exp %209 : vector<2x128xf32>
    %cst_34 = arith.constant dense<0.000000e+00> : vector<2xf32>
    %211 = vector.multi_reduction <add>, %210, %cst_34 [1] : vector<2x128xf32> to vector<2xf32>
    %212 = vector.shape_cast %211 : vector<2xf32> to vector<2x1xf32>
    %213 = math.log %212 : vector<2x1xf32>
    %214 = arith.addf %213, %207 : vector<2x1xf32>
    %215 = vector.broadcast %214 : vector<2x1xf32> to vector<2x128xf32>
    %216 = arith.subf %205, %215 : vector<2x128xf32>
    %c0_35 = arith.constant 0 : index
    %c0_36 = arith.constant 0 : index
    %217 = vector.load %arg6[%c0_35, %c0_36] : memref<2x128xf32, #tpu.memory_space<vmem>>, vector<2x128xf32>
    tpu.vector_store %arg6[%c0_35, %c0_36], %216 {strides = array<i32>} : memref<2x128xf32, #tpu.memory_space<vmem>>, vector<2x128xf32>,
    return
  }
}

</mosaic_0001>

<llo_original>
// kernel: _lambda_.1
$region0: #{_lambda_.1}
  #allocation0 [shape = 'u32[]', space=smem, size = 0x4, offset = 0x4, fixed_abs, tag = 'smem constant byte address 0x4 - core index']
  #allocation1 [shape = 'u32[144,128]{1,0:T(1,128)}', space=vmem, size = 0x12000, scoped, tag = 'internal scratch']
  %s0 = inlined_call_operand.vmem [shape: f32[16,16], index: 0, kind: input, shape index: {}]
  %s1 = inlined_call_operand.vmem [shape: bf16[16,256], index: 1, kind: input, shape index: {}]
  %s2 = inlined_call_operand.vmem [shape: f32[2,128], index: 2, kind: input, shape index: {}]
  %s3 = inlined_call_operand.vmem [shape: bf16[32,128], index: 3, kind: input, shape index: {}]
  %s4 = inlined_call_operand.vmem [shape: bf16[32,128], index: 4, kind: input, shape index: {}]
  %s5 = inlined_call_operand.vmem [shape: f32[1,128], index: 5, kind: input, shape index: {}]
  %s6 = inlined_call_operand.vmem [shape: f32[2,128], index: 6, kind: output, shape index: {}]
  %s7 = sld [smem:[#allocation0]]
  $region34: #{_lambda_.1} parent=0
    _
  %s9 = ssub.s32 1, %s7
  %s10 = scalar_select 0, %s9, %s7
  // Predicated region
  $region2: #{_lambda_.1} parent=0 // pred_check
    _
  $region3: #{_lambda_.1} parent=0 // pred_check_branch
    %12 = sbr.rel (0) target = $region5
  $region4: #{_lambda_.1} parent=0 // pred_region
    _
  $region5: #{_lambda_.1} parent=0 // pred_fallthru
    _
  // Predicated region
  $region6: #{_lambda_.1} parent=0 // pred_check
    _
  $region7: #{_lambda_.1} parent=0 // pred_check_branch
    %14 = sbr.rel (0) target = $region9
  $region8: #{_lambda_.1} parent=0 // pred_region
    _
  $region9: #{_lambda_.1} parent=0 // pred_fallthru
    _
  // Predicated region
  $region10: #{_lambda_.1} parent=0 // pred_check
    _
  $region11: #{_lambda_.1} parent=0 // pred_check_branch
    %16 = sbr.rel (0) target = $region13
  $region12: #{_lambda_.1} parent=0 // pred_region
    _
  $region13: #{_lambda_.1} parent=0 // pred_fallthru
    _
  // Predicated region
  $region14: #{_lambda_.1} parent=0 // pred_check
    _
  $region15: #{_lambda_.1} parent=0 // pred_check_branch
    %18 = sbr.rel (0) target = $region17
  $region16: #{_lambda_.1} parent=0 // pred_region
    _
  $region17: #{_lambda_.1} parent=0 // pred_fallthru
    _
  // Predicated region
  $region18: #{_lambda_.1} parent=0 // pred_check
    _
  $region19: #{_lambda_.1} parent=0 // pred_check_branch
    %20 = sbr.rel (0) target = $region21
  $region20: #{_lambda_.1} parent=0 // pred_region
    _
  $region21: #{_lambda_.1} parent=0 // pred_fallthru
    _
  // Predicated region
  $region22: #{_lambda_.1} parent=0 // pred_check
    _
  $region23: #{_lambda_.1} parent=0 // pred_check_branch
    %22 = sbr.rel (0) target = $region25
  $region24: #{_lambda_.1} parent=0 // pred_region
    _
  $region25: #{_lambda_.1} parent=0 // pred_fallthru
    _
  %v24 = vld [vmem:[%s0] sm:$0xff]
  %v25 = vld [vmem:[%s0 + $0x8] sm:$0xff]
  %v26 = vpack.c.bf16 %v25, %v24
  %v27 = vld [vmem:[%s1] sm:$0xff]
  %v28 = vld [vmem:[%s1 + $0x8] sm:$0xff]
  %v31 = vunpack.c.l.b16 %v27
  %v32 = vunpack.c.h.b16 %v27
  %v33 = vunpack.c.l.b16 %v28
  %v34 = vunpack.c.h.b16 %v28
  %v35 = vpack.c.b16 %v33, %v31
  %v36 = vpack.c.b16 %v34, %v32
  %vm39 = vcmask 130048
  %v41 = vsel %vm39, %v26, 0
  %43 = vmatprep.subr.bf16.mxu0 %v36
  %44 = vmatpush1.bf16.msra.mxu0 %v35
  %45 = vmatprep.subr.bf16.mxu0 0
  %46 = vmatpush1.bf16.msra.mxu0 0
  %47 = vmatprep.subr.bf16.mxu0 0
  %48 = vmatpush1.bf16.msra.mxu0 0
  %49 = vmatprep.subr.bf16.mxu0 0
  %50 = vmatpush1.bf16.msra.mxu0 0
  %51 = vmatprep.subr.bf16.mxu0 0
  %52 = vmatpush1.bf16.msra.mxu0 0
  %53 = vmatprep.subr.bf16.mxu0 0
  %54 = vmatpush1.bf16.msra.mxu0 0
  %55 = vmatprep.subr.bf16.mxu0 0
  %56 = vmatpush1.bf16.msra.mxu0 0
  %57 = vmatprep.subr.bf16.mxu0 0
  %58 = vmatpush1.bf16.msra.mxu0 0
  %59 = vmatprep.subr.bf16.mxu0 0
  %60 = vmatpush1.bf16.msra.mxu0 0
  %61 = vmatprep.subr.bf16.mxu0 0
  %62 = vmatpush1.bf16.msra.mxu0 0
  %63 = vmatprep.subr.bf16.mxu0 0
  %64 = vmatpush1.bf16.msra.mxu0 0
  %65 = vmatprep.subr.bf16.mxu0 0
  %66 = vmatpush1.bf16.msra.mxu0 0
  %67 = vmatprep.subr.bf16.mxu0 0
  %68 = vmatpush1.bf16.msra.mxu0 0
  %69 = vmatprep.subr.bf16.mxu0 0
  %70 = vmatpush1.bf16.msra.mxu0 0
  %71 = vmatprep.subr.bf16.mxu0 0
  %72 = vmatpush1.bf16.msra.mxu0 0
  %73 = vmatprep.subr.bf16.mxu0 0
  %74 = vmatpush1.bf16.msra.mxu0 0
  %75 = vmatprep.mubr.bf16.mxu0 0
  %76 = vmatmul.mubr.bf16.gmra.mrb[0].mxu0 %v41
  %v77 = vpop.f32.mrb[0].mxu0
  %v78 = vadd.f32 0.0, %v77
  %v79 = vpop.f32.mrb[0].mxu0
  %v80 = vadd.f32 0.0, %v79
  %v81 = vpop.f32.mrb[0].mxu0
  %v82 = vadd.f32 0.0, %v81
  %v83 = vpop.f32.mrb[0].mxu0
  %v84 = vadd.f32 0.0, %v83
  %85 = vdwg.mxu0
  %v86 = vld [vmem:[%s2] sm:$0x3]
  %v87 = vlaneseq
  %v88 = vshrl.u32 %v87, 7
  %v89 = vsub.s32 0, %v88
  %v90 = vrot.slane %v86, %v89
  %v91 = vadd.f32 %v78, %v90
  %v92 = vadd.f32 %v82, %v90
  %v93 = vlaneseq
  %v94 = vshrl.u32 %v93, 7
  %v95 = vsub.s32 1, %v94
  %v96 = vrot.slane %v86, %v95
  %v97 = vadd.f32 %v80, %v96
  %v98 = vadd.f32 %v84, %v96
  %v99 = vld [vmem:[%s3] sm:$0xf]
  %v100 = vld [vmem:[%s3 + $0x4] sm:$0xf]
  %v101 = vld [vmem:[%s3 + $0x8] sm:$0xf]
  %v102 = vld [vmem:[%s3 + $0xc] sm:$0xf]
  %v104 = vrot.slane %v98, 6
  %v106 = vadd.f32 %v91, %v104
  %v111 = vunpack.c.l.b16 %v99
  %v112 = vunpack.c.l.b16 %v100
  %v113 = vunpack.c.l.b16 %v101
  %v114 = vunpack.c.l.b16 %v102
  %v115 = vpack.c.b16 %v112, %v111
  %v116 = vpack.c.b16 %v114, %v113
  %vm119 = vcmask 261120
  %v121 = vsel %vm119, 0, 0
  %123 = vmatprep.subr.bf16.mxu0 0
  %124 = vmatpush1.bf16.msra.mxu0 %v115
  %125 = vmatprep.subr.bf16.mxu0 0
  %126 = vmatpush1.bf16.msra.mxu0 %v116
  %127 = vmatprep.subr.bf16.mxu0 0
  %128 = vmatpush1.bf16.msra.mxu0 0
  %129 = vmatprep.subr.bf16.mxu0 0
  %130 = vmatpush1.bf16.msra.mxu0 0
  %131 = vmatprep.subr.bf16.mxu0 0
  %132 = vmatpush1.bf16.msra.mxu0 0
  %133 = vmatprep.subr.bf16.mxu0 0
  %134 = vmatpush1.bf16.msra.mxu0 0
  %135 = vmatprep.subr.bf16.mxu0 0
  %136 = vmatpush1.bf16.msra.mxu0 0
  %137 = vmatprep.subr.bf16.mxu0 0
  %138 = vmatpush1.bf16.msra.mxu0 0
  %139 = vmatprep.subr.bf16.mxu0 0
  %140 = vmatpush1.bf16.msra.mxu0 0
  %141 = vmatprep.subr.bf16.mxu0 0
  %142 = vmatpush1.bf16.msra.mxu0 0
  %143 = vmatprep.subr.bf16.mxu0 0
  %144 = vmatpush1.bf16.msra.mxu0 0
  %145 = vmatprep.subr.bf16.mxu0 0
  %146 = vmatpush1.bf16.msra.mxu0 0
  %147 = vmatprep.subr.bf16.mxu0 0
  %148 = vmatpush1.bf16.msra.mxu0 0
  %149 = vmatprep.subr.bf16.mxu0 0
  %150 = vmatpush1.bf16.msra.mxu0 0
  %151 = vmatprep.subr.bf16.mxu0 0
  %152 = vmatpush1.bf16.msra.mxu0 0
  %153 = vmatprep.subr.bf16.mxu0 0
  %154 = vmatpush1.bf16.msra.mxu0 0
  %155 = vmatprep.mubr.bf16.mxu0 0
  %156 = vmatmul.mubr.bf16.gmra.mrb[0].mxu0 %v121
  %v157 = vpop.f32.mrb[0].mxu0
  %v158 = vadd.f32 0.0, %v157
  %v159 = vpop.f32.mrb[0].mxu0
  %v160 = vpop.f32.mrb[0].mxu0
  %v161 = vpop.f32.mrb[0].mxu0
  %162 = vdwg.mxu0
  %v163 = vadd.f32 %v106, %v158
  %v164 = vxor.u32 %v163, 2147483648
  %v165 = vmul.f32 %v164, 1.442695
  %v166 = vpow.pop %v165
  %v167 = vadd.f32 %v166, 1.0
  %v168 = vrcp.pop %v167
  %v169 = vmul.f32 1.0, %v168
  %v170 = vtanh.pop %v163
  %v171 = vmul.f32 %v169, 0.0
  %173 = vrot.lane.b32.xlu0 %v170, 64
  %v174 = vpop.permute.xlu0 %173
  %v176 = vmul.f32 %v169, %v174
  %178 = vrot.lane.b32.xlu0 %v176, 32
  %v179 = vpop.permute.xlu0 %178
  %v181 = vadd.f32 %v171, %v179
  %v182 = vtanh.pop %v181
  %184 = vrot.lane.b32.xlu0 %v182, 64
  %v185 = vpop.permute.xlu0 %184
  %v187 = vmul.f32 %v169, %v185
  %v188 = vadd.f32 %v187, 0.0
  %v189 = vrot.slane %v98, 2
  %v191 = vadd.f32 %v91, %v189
  %v192 = vpack.c.bf16 %v187, %v187
  %194 = vrot.lane.b32.xlu0 %v192, 32
  %v195 = vpop.permute.xlu0 %194
  %v197 = vsel %vm119, %v195, 0
  %199 = vmatprep.subr.bf16.mxu0 0
  %200 = vmatpush1.bf16.msra.mxu0 %v115
  %201 = vmatprep.subr.bf16.mxu0 0
  %202 = vmatpush1.bf16.msra.mxu0 %v116
  %203 = vmatprep.subr.bf16.mxu0 0
  %204 = vmatpush1.bf16.msra.mxu0 0
  %205 = vmatprep.subr.bf16.mxu0 0
  %206 = vmatpush1.bf16.msra.mxu0 0
  %207 = vmatprep.subr.bf16.mxu0 0
  %208 = vmatpush1.bf16.msra.mxu0 0
  %209 = vmatprep.subr.bf16.mxu0 0
  %210 = vmatpush1.bf16.msra.mxu0 0
  %211 = vmatprep.subr.bf16.mxu0 0
  %212 = vmatpush1.bf16.msra.mxu0 0
  %213 = vmatprep.subr.bf16.mxu0 0
  %214 = vmatpush1.bf16.msra.mxu0 0
  %215 = vmatprep.subr.bf16.mxu0 0
  %216 = vmatpush1.bf16.msra.mxu0 0
  %217 = vmatprep.subr.bf16.mxu0 0
  %218 = vmatpush1.bf16.msra.mxu0 0
  %219 = vmatprep.subr.bf16.mxu0 0
  %220 = vmatpush1.bf16.msra.mxu0 0
  %221 = vmatprep.subr.bf16.mxu0 0
  %222 = vmatpush1.bf16.msra.mxu0 0
  %223 = vmatprep.subr.bf16.mxu0 0
  %224 = vmatpush1.bf16.msra.mxu0 0
  %225 = vmatprep.subr.bf16.mxu0 0
  %226 = vmatpush1.bf16.msra.mxu0 0
  %227 = vmatprep.subr.bf16.mxu0 0
  %228 = vmatpush1.bf16.msra.mxu0 0
  %229 = vmatprep.subr.bf16.mxu0 0
  %230 = vmatpush1.bf16.msra.mxu0 0
  %231 = vmatprep.mubr.bf16.mxu0 0
  %232 = vmatmul.mubr.bf16.gmra.mrb[0].mxu0 %v197
  %v233 = vpop.f32.mrb[0].mxu0
  %v234 = vadd.f32 0.0, %v233
  %v235 = vpop.f32.mrb[0].mxu0
  %v236 = vpop.f32.mrb[0].mxu0
  %v237 = vpop.f32.mrb[0].mxu0
  %238 = vdwg.mxu0
  %v240 = vrot.slane %v234, 6
  %v242 = vadd.f32 %v191, %v240
  %v243 = vxor.u32 %v242, 2147483648
  %v244 = vmul.f32 %v243, 1.442695
  %v245 = vpow.pop %v244
  %v246 = vadd.f32 %v245, 1.0
  %v247 = vrcp.pop %v246
  %v248 = vmul.f32 1.0, %v247
  %v249 = vtanh.pop %v242
  %v251 = vrot.slane %v181, 6
  %v253 = vmul.f32 %v248, %v251
  %255 = vrot.lane.b32.xlu0 %v249, 64
  %v256 = vpop.permute.xlu0 %255
  %v258 = vmul.f32 %v248, %v256
  %260 = vrot.lane.b32.xlu0 %v258, 32
  %v261 = vpop.permute.xlu0 %260
  %v263 = vadd.f32 %v253, %v261
  %v264 = vtanh.pop %v263
  %266 = vrot.lane.b32.xlu0 %v264, 64
  %v267 = vpop.permute.xlu0 %266
  %v269 = vmul.f32 %v248, %v267
  %v271 = vrot.slane %v269, 2
  %v273 = vadd.f32 %v188, %v271
  %v274 = vpack.c.bf16 %v269, %v269
  %v276 = vrot.slane %v274, 1
  %277 = vrot.lane.b32.xlu0 %v276, 32
  %v278 = vpop.permute.xlu0 %277
  %v280 = vsel %vm119, %v278, 0
  %282 = vmatprep.subr.bf16.mxu0 0
  %283 = vmatpush1.bf16.msra.mxu0 %v115
  %284 = vmatprep.subr.bf16.mxu0 0
  %285 = vmatpush1.bf16.msra.mxu0 %v116
  %286 = vmatprep.subr.bf16.mxu0 0
  %287 = vmatpush1.bf16.msra.mxu0 0
  %288 = vmatprep.subr.bf16.mxu0 0
  %289 = vmatpush1.bf16.msra.mxu0 0
  %290 = vmatprep.subr.bf16.mxu0 0
  %291 = vmatpush1.bf16.msra.mxu0 0
  %292 = vmatprep.subr.bf16.mxu0 0
  %293 = vmatpush1.bf16.msra.mxu0 0
  %294 = vmatprep.subr.bf16.mxu0 0
  %295 = vmatpush1.bf16.msra.mxu0 0
  %296 = vmatprep.subr.bf16.mxu0 0
  %297 = vmatpush1.bf16.msra.mxu0 0
  %298 = vmatprep.subr.bf16.mxu0 0
  %299 = vmatpush1.bf16.msra.mxu0 0
  %300 = vmatprep.subr.bf16.mxu0 0
  %301 = vmatpush1.bf16.msra.mxu0 0
  %302 = vmatprep.subr.bf16.mxu0 0
  %303 = vmatpush1.bf16.msra.mxu0 0
  %304 = vmatprep.subr.bf16.mxu0 0
  %305 = vmatpush1.bf16.msra.mxu0 0
  %306 = vmatprep.subr.bf16.mxu0 0
  %307 = vmatpush1.bf16.msra.mxu0 0
  %308 = vmatprep.subr.bf16.mxu0 0
  %309 = vmatpush1.bf16.msra.mxu0 0
  %310 = vmatprep.subr.bf16.mxu0 0
  %311 = vmatpush1.bf16.msra.mxu0 0
  %312 = vmatprep.subr.bf16.mxu0 0
  %313 = vmatpush1.bf16.msra.mxu0 0
  %314 = vmatprep.mubr.bf16.mxu0 0
  %315 = vmatmul.mubr.bf16.gmra.mrb[0].mxu0 %v280
  %v316 = vpop.f32.mrb[0].mxu0
  %v317 = vadd.f32 0.0, %v316
  %v318 = vpop.f32.mrb[0].mxu0
  %v319 = vpop.f32.mrb[0].mxu0
  %v320 = vpop.f32.mrb[0].mxu0
  %321 = vdwg.mxu0
  %v323 = vrot.slane %v317, 4
  %v325 = vadd.f32 %v106, %v323
  %v326 = vxor.u32 %v325, 2147483648
  %v327 = vmul.f32 %v326, 1.442695
  %v328 = vpow.pop %v327
  %v329 = vadd.f32 %v328, 1.0
  %v330 = vrcp.pop %v329
  %v331 = vmul.f32 1.0, %v330
  %v332 = vtanh.pop %v325
  %v334 = vrot.slane %v263, 6
  %v336 = vmul.f32 %v331, %v334
  %338 = vrot.lane.b32.xlu0 %v332, 64
  %v339 = vpop.permute.xlu0 %338
  %v341 = vmul.f32 %v331, %v339
  %343 = vrot.lane.b32.xlu0 %v341, 32
  %v344 = vpop.permute.xlu0 %343
  %v346 = vadd.f32 %v336, %v344
  %v347 = vtanh.pop %v346
  %349 = vrot.lane.b32.xlu0 %v347, 64
  %v350 = vpop.permute.xlu0 %349
  %v352 = vmul.f32 %v331, %v350
  %v354 = vrot.slane %v352, 4
  %v356 = vadd.f32 %v273, %v354
  %v357 = vpack.c.bf16 %v352, %v352
  %v359 = vrot.slane %v357, 2
  %360 = vrot.lane.b32.xlu0 %v359, 32
  %v361 = vpop.permute.xlu0 %360
  %v363 = vsel %vm119, %v361, 0
  %365 = vmatprep.subr.bf16.mxu0 0
  %366 = vmatpush1.bf16.msra.mxu0 %v115
  %367 = vmatprep.subr.bf16.mxu0 0
  %368 = vmatpush1.bf16.msra.mxu0 %v116
  %369 = vmatprep.subr.bf16.mxu0 0
  %370 = vmatpush1.bf16.msra.mxu0 0
  %371 = vmatprep.subr.bf16.mxu0 0
  %372 = vmatpush1.bf16.msra.mxu0 0
  %373 = vmatprep.subr.bf16.mxu0 0
  %374 = vmatpush1.bf16.msra.mxu0 0
  %375 = vmatprep.subr.bf16.mxu0 0
  %376 = vmatpush1.bf16.msra.mxu0 0
  %377 = vmatprep.subr.bf16.mxu0 0
  %378 = vmatpush1.bf16.msra.mxu0 0
  %379 = vmatprep.subr.bf16.mxu0 0
  %380 = vmatpush1.bf16.msra.mxu0 0
  %381 = vmatprep.subr.bf16.mxu0 0
  %382 = vmatpush1.bf16.msra.mxu0 0
  %383 = vmatprep.subr.bf16.mxu0 0
  %384 = vmatpush1.bf16.msra.mxu0 0
  %385 = vmatprep.subr.bf16.mxu0 0
  %386 = vmatpush1.bf16.msra.mxu0 0
  %387 = vmatprep.subr.bf16.mxu0 0
  %388 = vmatpush1.bf16.msra.mxu0 0
  %389 = vmatprep.subr.bf16.mxu0 0
  %390 = vmatpush1.bf16.msra.mxu0 0
  %391 = vmatprep.subr.bf16.mxu0 0
  %392 = vmatpush1.bf16.msra.mxu0 0
  %393 = vmatprep.subr.bf16.mxu0 0
  %394 = vmatpush1.bf16.msra.mxu0 0
  %395 = vmatprep.subr.bf16.mxu0 0
  %396 = vmatpush1.bf16.msra.mxu0 0
  %397 = vmatprep.mubr.bf16.mxu0 0
  %398 = vmatmul.mubr.bf16.gmra.mrb[0].mxu0 %v363
  %v399 = vpop.f32.mrb[0].mxu0
  %v400 = vadd.f32 0.0, %v399
  %v401 = vpop.f32.mrb[0].mxu0
  %v402 = vpop.f32.mrb[0].mxu0
  %v403 = vpop.f32.mrb[0].mxu0
  %404 = vdwg.mxu0
  %v406 = vrot.slane %v400, 2
  %v408 = vadd.f32 %v191, %v406
  %v409 = vxor.u32 %v408, 2147483648
  %v410 = vmul.f32 %v409, 1.442695
  %v411 = vpow.pop %v410
  %v412 = vadd.f32 %v411, 1.0
  %v413 = vrcp.pop %v412
  %v414 = vmul.f32 1.0, %v413
  %v415 = vtanh.pop %v408
  %v417 = vrot.slane %v346, 6
  %v419 = vmul.f32 %v414, %v417
  %421 = vrot.lane.b32.xlu0 %v415, 64
  %v422 = vpop.permute.xlu0 %421
  %v424 = vmul.f32 %v414, %v422
  %426 = vrot.lane.b32.xlu0 %v424, 32
  %v427 = vpop.permute.xlu0 %426
  %v429 = vadd.f32 %v419, %v427
  %v430 = vtanh.pop %v429
  %432 = vrot.lane.b32.xlu0 %v430, 64
  %v433 = vpop.permute.xlu0 %432
  %v435 = vmul.f32 %v414, %v433
  %v437 = vrot.slane %v435, 6
  %v439 = vadd.f32 %v356, %v437
  %v441 = vrot.slane %v97, 6
  %v443 = vadd.f32 %v92, %v441
  %v444 = vpack.c.bf16 %v435, %v435
  %v446 = vrot.slane %v444, 3
  %447 = vrot.lane.b32.xlu0 %v446, 32
  %v448 = vpop.permute.xlu0 %447
  %v450 = vsel %vm119, %v448, 0
  %452 = vmatprep.subr.bf16.mxu0 0
  %453 = vmatpush1.bf16.msra.mxu0 %v115
  %454 = vmatprep.subr.bf16.mxu0 0
  %455 = vmatpush1.bf16.msra.mxu0 %v116
  %456 = vmatprep.subr.bf16.mxu0 0
  %457 = vmatpush1.bf16.msra.mxu0 0
  %458 = vmatprep.subr.bf16.mxu0 0
  %459 = vmatpush1.bf16.msra.mxu0 0
  %460 = vmatprep.subr.bf16.mxu0 0
  %461 = vmatpush1.bf16.msra.mxu0 0
  %462 = vmatprep.subr.bf16.mxu0 0
  %463 = vmatpush1.bf16.msra.mxu0 0
  %464 = vmatprep.subr.bf16.mxu0 0
  %465 = vmatpush1.bf16.msra.mxu0 0
  %466 = vmatprep.subr.bf16.mxu0 0
  %467 = vmatpush1.bf16.msra.mxu0 0
  %468 = vmatprep.subr.bf16.mxu0 0
  %469 = vmatpush1.bf16.msra.mxu0 0
  %470 = vmatprep.subr.bf16.mxu0 0
  %471 = vmatpush1.bf16.msra.mxu0 0
  %472 = vmatprep.subr.bf16.mxu0 0
  %473 = vmatpush1.bf16.msra.mxu0 0
  %474 = vmatprep.subr.bf16.mxu0 0
  %475 = vmatpush1.bf16.msra.mxu0 0
  %476 = vmatprep.subr.bf16.mxu0 0
  %477 = vmatpush1.bf16.msra.mxu0 0
  %478 = vmatprep.subr.bf16.mxu0 0
  %479 = vmatpush1.bf16.msra.mxu0 0
  %480 = vmatprep.subr.bf16.mxu0 0
  %481 = vmatpush1.bf16.msra.mxu0 0
  %482 = vmatprep.subr.bf16.mxu0 0
  %483 = vmatpush1.bf16.msra.mxu0 0
  %484 = vmatprep.mubr.bf16.mxu0 0
  %485 = vmatmul.mubr.bf16.gmra.mrb[0].mxu0 %v450
  %v486 = vpop.f32.mrb[0].mxu0
  %v487 = vadd.f32 0.0, %v486
  %v488 = vpop.f32.mrb[0].mxu0
  %v489 = vpop.f32.mrb[0].mxu0
  %v490 = vpop.f32.mrb[0].mxu0
  %491 = vdwg.mxu0
  %v492 = vadd.f32 %v443, %v487
  %v493 = vxor.u32 %v492, 2147483648
  %v494 = vmul.f32 %v493, 1.442695
  %v495 = vpow.pop %v494
  %v496 = vadd.f32 %v495, 1.0
  %v497 = vrcp.pop %v496
  %v498 = vmul.f32 1.0, %v497
  %v499 = vtanh.pop %v492
  %v501 = vrot.slane %v429, 6
  %v503 = vmul.f32 %v498, %v501
  %505 = vrot.lane.b32.xlu0 %v499, 64
  %v506 = vpop.permute.xlu0 %505
  %v508 = vmul.f32 %v498, %v506
  %510 = vrot.lane.b32.xlu0 %v508, 32
  %v511 = vpop.permute.xlu0 %510
  %v513 = vadd.f32 %v503, %v511
  %v514 = vtanh.pop %v513
  %516 = vrot.lane.b32.xlu0 %v514, 64
  %v517 = vpop.permute.xlu0 %516
  %v519 = vmul.f32 %v498, %v517
  %v520 = vadd.f32 %v439, %v519
  %v521 = vrot.slane %v97, 2
  %v523 = vadd.f32 %v92, %v521
  %v524 = vpack.c.bf16 %v519, %v519
  %526 = vrot.lane.b32.xlu0 %v524, 32
  %v527 = vpop.permute.xlu0 %526
  %v529 = vsel %vm119, %v527, 0
  %531 = vmatprep.subr.bf16.mxu0 0
  %532 = vmatpush1.bf16.msra.mxu0 %v115
  %533 = vmatprep.subr.bf16.mxu0 0
  %534 = vmatpush1.bf16.msra.mxu0 %v116
  %535 = vmatprep.subr.bf16.mxu0 0
  %536 = vmatpush1.bf16.msra.mxu0 0
  %537 = vmatprep.subr.bf16.mxu0 0
  %538 = vmatpush1.bf16.msra.mxu0 0
  %539 = vmatprep.subr.bf16.mxu0 0
  %540 = vmatpush1.bf16.msra.mxu0 0
  %541 = vmatprep.subr.bf16.mxu0 0
  %542 = vmatpush1.bf16.msra.mxu0 0
  %543 = vmatprep.subr.bf16.mxu0 0
  %544 = vmatpush1.bf16.msra.mxu0 0
  %545 = vmatprep.subr.bf16.mxu0 0
  %546 = vmatpush1.bf16.msra.mxu0 0
  %547 = vmatprep.subr.bf16.mxu0 0
  %548 = vmatpush1.bf16.msra.mxu0 0
  %549 = vmatprep.subr.bf16.mxu0 0
  %550 = vmatpush1.bf16.msra.mxu0 0
  %551 = vmatprep.subr.bf16.mxu0 0
  %552 = vmatpush1.bf16.msra.mxu0 0
  %553 = vmatprep.subr.bf16.mxu0 0
  %554 = vmatpush1.bf16.msra.mxu0 0
  %555 = vmatprep.subr.bf16.mxu0 0
  %556 = vmatpush1.bf16.msra.mxu0 0
  %557 = vmatprep.subr.bf16.mxu0 0
  %558 = vmatpush1.bf16.msra.mxu0 0
  %559 = vmatprep.subr.bf16.mxu0 0
  %560 = vmatpush1.bf16.msra.mxu0 0
  %561 = vmatprep.subr.bf16.mxu0 0
  %562 = vmatpush1.bf16.msra.mxu0 0
  %563 = vmatprep.mubr.bf16.mxu0 0
  %564 = vmatmul.mubr.bf16.gmra.mrb[0].mxu0 %v529
  %v565 = vpop.f32.mrb[0].mxu0
  %v566 = vadd.f32 0.0, %v565
  %v567 = vpop.f32.mrb[0].mxu0
  %v568 = vpop.f32.mrb[0].mxu0
  %v569 = vpop.f32.mrb[0].mxu0
  %570 = vdwg.mxu0
  %v572 = vrot.slane %v566, 6
  %v574 = vadd.f32 %v523, %v572
  %v575 = vxor.u32 %v574, 2147483648
  %v576 = vmul.f32 %v575, 1.442695
  %v577 = vpow.pop %v576
  %v578 = vadd.f32 %v577, 1.0
  %v579 = vrcp.pop %v578
  %v580 = vmul.f32 1.0, %v579
  %v581 = vtanh.pop %v574
  %v583 = vrot.slane %v513, 6
  %v585 = vmul.f32 %v580, %v583
  %587 = vrot.lane.b32.xlu0 %v581, 64
  %v588 = vpop.permute.xlu0 %587
  %v590 = vmul.f32 %v580, %v588
  %592 = vrot.lane.b32.xlu0 %v590, 32
  %v593 = vpop.permute.xlu0 %592
  %v595 = vadd.f32 %v585, %v593
  %v596 = vtanh.pop %v595
  %598 = vrot.lane.b32.xlu0 %v596, 64
  %v599 = vpop.permute.xlu0 %598
  %v601 = vmul.f32 %v580, %v599
  %v603 = vrot.slane %v601, 2
  %v605 = vadd.f32 %v520, %v603
  %v606 = vpack.c.bf16 %v601, %v601
  %v608 = vrot.slane %v606, 1
  %609 = vrot.lane.b32.xlu0 %v608, 32
  %v610 = vpop.permute.xlu0 %609
  %v612 = vsel %vm119, %v610, 0
  %614 = vmatprep.subr.bf16.mxu0 0
  %615 = vmatpush1.bf16.msra.mxu0 %v115
  %616 = vmatprep.subr.bf16.mxu0 0
  %617 = vmatpush1.bf16.msra.mxu0 %v116
  %618 = vmatprep.subr.bf16.mxu0 0
  %619 = vmatpush1.bf16.msra.mxu0 0
  %620 = vmatprep.subr.bf16.mxu0 0
  %621 = vmatpush1.bf16.msra.mxu0 0
  %622 = vmatprep.subr.bf16.mxu0 0
  %623 = vmatpush1.bf16.msra.mxu0 0
  %624 = vmatprep.subr.bf16.mxu0 0
  %625 = vmatpush1.bf16.msra.mxu0 0
  %626 = vmatprep.subr.bf16.mxu0 0
  %627 = vmatpush1.bf16.msra.mxu0 0
  %628 = vmatprep.subr.bf16.mxu0 0
  %629 = vmatpush1.bf16.msra.mxu0 0
  %630 = vmatprep.subr.bf16.mxu0 0
  %631 = vmatpush1.bf16.msra.mxu0 0
  %632 = vmatprep.subr.bf16.mxu0 0
  %633 = vmatpush1.bf16.msra.mxu0 0
  %634 = vmatprep.subr.bf16.mxu0 0
  %635 = vmatpush1.bf16.msra.mxu0 0
  %636 = vmatprep.subr.bf16.mxu0 0
  %637 = vmatpush1.bf16.msra.mxu0 0
  %638 = vmatprep.subr.bf16.mxu0 0
  %639 = vmatpush1.bf16.msra.mxu0 0
  %640 = vmatprep.subr.bf16.mxu0 0
  %641 = vmatpush1.bf16.msra.mxu0 0
  %642 = vmatprep.subr.bf16.mxu0 0
  %643 = vmatpush1.bf16.msra.mxu0 0
  %644 = vmatprep.subr.bf16.mxu0 0
  %645 = vmatpush1.bf16.msra.mxu0 0
  %646 = vmatprep.mubr.bf16.mxu0 0
  %647 = vmatmul.mubr.bf16.gmra.mrb[0].mxu0 %v612
  %v648 = vpop.f32.mrb[0].mxu0
  %v649 = vadd.f32 0.0, %v648
  %v650 = vpop.f32.mrb[0].mxu0
  %v651 = vpop.f32.mrb[0].mxu0
  %v652 = vpop.f32.mrb[0].mxu0
  %653 = vdwg.mxu0
  %v655 = vrot.slane %v649, 4
  %v657 = vadd.f32 %v443, %v655
  %v658 = vxor.u32 %v657, 2147483648
  %v659 = vmul.f32 %v658, 1.442695
  %v660 = vpow.pop %v659
  %v661 = vadd.f32 %v660, 1.0
  %v662 = vrcp.pop %v661
  %v663 = vmul.f32 1.0, %v662
  %v664 = vtanh.pop %v657
  %v666 = vrot.slane %v595, 6
  %v668 = vmul.f32 %v663, %v666
  %670 = vrot.lane.b32.xlu0 %v664, 64
  %v671 = vpop.permute.xlu0 %670
  %v673 = vmul.f32 %v663, %v671
  %675 = vrot.lane.b32.xlu0 %v673, 32
  %v676 = vpop.permute.xlu0 %675
  %v678 = vadd.f32 %v668, %v676
  %v679 = vtanh.pop %v678
  %681 = vrot.lane.b32.xlu0 %v679, 64
  %v682 = vpop.permute.xlu0 %681
  %v684 = vmul.f32 %v663, %v682
  %v686 = vrot.slane %v684, 4
  %v688 = vadd.f32 %v605, %v686
  %v689 = vpack.c.bf16 %v684, %v684
  %v691 = vrot.slane %v689, 2
  %692 = vrot.lane.b32.xlu0 %v691, 32
  %v693 = vpop.permute.xlu0 %692
  %v695 = vsel %vm119, %v693, 0
  %697 = vmatprep.subr.bf16.mxu0 0
  %698 = vmatpush1.bf16.msra.mxu0 %v115
  %699 = vmatprep.subr.bf16.mxu0 0
  %700 = vmatpush1.bf16.msra.mxu0 %v116
  %701 = vmatprep.subr.bf16.mxu0 0
  %702 = vmatpush1.bf16.msra.mxu0 0
  %703 = vmatprep.subr.bf16.mxu0 0
  %704 = vmatpush1.bf16.msra.mxu0 0
  %705 = vmatprep.subr.bf16.mxu0 0
  %706 = vmatpush1.bf16.msra.mxu0 0
  %707 = vmatprep.subr.bf16.mxu0 0
  %708 = vmatpush1.bf16.msra.mxu0 0
  %709 = vmatprep.subr.bf16.mxu0 0
  %710 = vmatpush1.bf16.msra.mxu0 0
  %711 = vmatprep.subr.bf16.mxu0 0
  %712 = vmatpush1.bf16.msra.mxu0 0
  %713 = vmatprep.subr.bf16.mxu0 0
  %714 = vmatpush1.bf16.msra.mxu0 0
  %715 = vmatprep.subr.bf16.mxu0 0
  %716 = vmatpush1.bf16.msra.mxu0 0
  %717 = vmatprep.subr.bf16.mxu0 0
  %718 = vmatpush1.bf16.msra.mxu0 0
  %719 = vmatprep.subr.bf16.mxu0 0
  %720 = vmatpush1.bf16.msra.mxu0 0
  %721 = vmatprep.subr.bf16.mxu0 0
  %722 = vmatpush1.bf16.msra.mxu0 0
  %723 = vmatprep.subr.bf16.mxu0 0
  %724 = vmatpush1.bf16.msra.mxu0 0
  %725 = vmatprep.subr.bf16.mxu0 0
  %726 = vmatpush1.bf16.msra.mxu0 0
  %727 = vmatprep.subr.bf16.mxu0 0
  %728 = vmatpush1.bf16.msra.mxu0 0
  %729 = vmatprep.mubr.bf16.mxu0 0
  %730 = vmatmul.mubr.bf16.gmra.mrb[0].mxu0 %v695
  %v731 = vpop.f32.mrb[0].mxu0
  %v732 = vadd.f32 0.0, %v731
  %v733 = vpop.f32.mrb[0].mxu0
  %v734 = vpop.f32.mrb[0].mxu0
  %v735 = vpop.f32.mrb[0].mxu0
  %736 = vdwg.mxu0
  %v738 = vrot.slane %v732, 2
  %v740 = vadd.f32 %v523, %v738
  %v741 = vxor.u32 %v740, 2147483648
  %v742 = vmul.f32 %v741, 1.442695
  %v743 = vpow.pop %v742
  %v744 = vadd.f32 %v743, 1.0
  %v745 = vrcp.pop %v744
  %v746 = vmul.f32 1.0, %v745
  %v747 = vtanh.pop %v740
  %v749 = vrot.slane %v678, 6
  %v751 = vmul.f32 %v746, %v749
  %753 = vrot.lane.b32.xlu0 %v747, 64
  %v754 = vpop.permute.xlu0 %753
  %v756 = vmul.f32 %v746, %v754
  %758 = vrot.lane.b32.xlu0 %v756, 32
  %v759 = vpop.permute.xlu0 %758
  %v761 = vadd.f32 %v751, %v759
  %v762 = vtanh.pop %v761
  %764 = vrot.lane.b32.xlu0 %v762, 64
  %v765 = vpop.permute.xlu0 %764
  %v767 = vmul.f32 %v746, %v765
  %v769 = vrot.slane %v767, 6
  %v771 = vadd.f32 %v688, %v769
  %v772 = vpack.c.bf16 %v771, %v771
  %v773 = vld [vmem:[%s4] sm:$0xf]
  %v774 = vld [vmem:[%s4 + $0x4] sm:$0xf]
  %v775 = vld [vmem:[%s4 + $0x8] sm:$0xf]
  %v776 = vld [vmem:[%s4 + $0xc] sm:$0xf]
  %778 = vrot.lane.b32.xlu0 %v772, 32
  %v779 = vpop.permute.xlu0 %778
  %v784 = vunpack.c.l.b16 %v773
  %v785 = vunpack.c.l.b16 %v774
  %v786 = vunpack.c.l.b16 %v775
  %v787 = vunpack.c.l.b16 %v776
  %v788 = vpack.c.b16 %v785, %v784
  %v789 = vpack.c.b16 %v787, %v786
  %v793 = vsel %vm119, %v779, 0
  %795 = vmatprep.subr.bf16.mxu0 0
  %796 = vmatpush1.bf16.msra.mxu0 %v788
  %797 = vmatprep.subr.bf16.mxu0 0
  %798 = vmatpush1.bf16.msra.mxu0 %v789
  %799 = vmatprep.subr.bf16.mxu0 0
  %800 = vmatpush1.bf16.msra.mxu0 0
  %801 = vmatprep.subr.bf16.mxu0 0
  %802 = vmatpush1.bf16.msra.mxu0 0
  %803 = vmatprep.subr.bf16.mxu0 0
  %804 = vmatpush1.bf16.msra.mxu0 0
  %805 = vmatprep.subr.bf16.mxu0 0
  %806 = vmatpush1.bf16.msra.mxu0 0
  %807 = vmatprep.subr.bf16.mxu0 0
  %808 = vmatpush1.bf16.msra.mxu0 0
  %809 = vmatprep.subr.bf16.mxu0 0
  %810 = vmatpush1.bf16.msra.mxu0 0
  %811 = vmatprep.subr.bf16.mxu0 0
  %812 = vmatpush1.bf16.msra.mxu0 0
  %813 = vmatprep.subr.bf16.mxu0 0
  %814 = vmatpush1.bf16.msra.mxu0 0
  %815 = vmatprep.subr.bf16.mxu0 0
  %816 = vmatpush1.bf16.msra.mxu0 0
  %817 = vmatprep.subr.bf16.mxu0 0
  %818 = vmatpush1.bf16.msra.mxu0 0
  %819 = vmatprep.subr.bf16.mxu0 0
  %820 = vmatpush1.bf16.msra.mxu0 0
  %821 = vmatprep.subr.bf16.mxu0 0
  %822 = vmatpush1.bf16.msra.mxu0 0
  %823 = vmatprep.subr.bf16.mxu0 0
  %824 = vmatpush1.bf16.msra.mxu0 0
  %825 = vmatprep.subr.bf16.mxu0 0
  %826 = vmatpush1.bf16.msra.mxu0 0
  %827 = vmatprep.mubr.bf16.mxu0 0
  %828 = vmatmul.mubr.bf16.gmra.mrb[0].mxu0 %v793
  %v829 = vpop.f32.mrb[0].mxu0
  %v830 = vadd.f32 0.0, %v829
  %v831 = vpop.f32.mrb[0].mxu0
  %v832 = vpop.f32.mrb[0].mxu0
  %v833 = vpop.f32.mrb[0].mxu0
  %834 = vdwg.mxu0
  %v835 = vmul.f32 %v830, 0.125
  %v836 = vld [vmem:[%s5] sm:$0x1]
  %v838 = vlaneseq
  %v839 = vshrl.u32 %v838, 7
  %v840 = vsub.s32 0, %v839
  %v841 = vrot.slane %v836, %v840
  %v843 = vadd.f32 %v835, %v841
  %v844 = vlaneseq
  %v845 = vand.u32 %v844, 127
  %vm846 = vcmp.lt.s32.totalorder %v845, 4
  %v847 = vsel %vm846, %v843, -1e+30
  %vm848 = vcmask 1041408
  %v849 = vsel %vm848, %v847, -inf
  %850 = vmax.xlane.f32.xlu0 %v849
  %v851 = vpop.xlane.xlu0 %850
  %v852 = vsub.f32 %v847, %v851
  %v853 = vmul.f32 %v852, 1.442695
  %v854 = vpow.pop %v853
  %v855 = vsel %vm848, %v854, 0.0
  %856 = vadd.xlane.f32.xlu0 %v855
  %v857 = vpop.xlane.xlu0 %856
  %v858 = vlog2.pop %v857
  %v859 = vmul.f32 %v858, 0.6931472
  %v860 = vadd.f32 %v859, %v851
  %v861 = vsub.f32 %v847, %v860
  %862 = vst [vmem:[%s6] sm:$0x3] %v861
  // Predicated region
  $region26: #{_lambda_.1} parent=0 // pred_check
    _
  $region27: #{_lambda_.1} parent=0 // pred_check_branch
    %864 = sbr.rel (0) target = $region29
  $region28: #{_lambda_.1} parent=0 // pred_region
    _
  $region29: #{_lambda_.1} parent=0 // pred_fallthru
    _
  // Predicated region
  $region30: #{_lambda_.1} parent=0 // pred_check
    _
  $region31: #{_lambda_.1} parent=0 // pred_check_branch
    %866 = sbr.rel (0) target = $region33
  $region32: #{_lambda_.1} parent=0 // pred_region
    _
  $region33: #{_lambda_.1} parent=0 // pred_fallthru
    _

</llo_original>
